<compile_context>
chip_gen: v7x
topology: tpu7x:2x2x1
jax: 0.10.0
libtpu: 0.0.40
codegen_flags: <defaults>
</compile_context>

<pallas_src>
import functools

import jax
import jax.numpy as jnp
import numpy as np
from jax import lax
from jax.experimental import pallas as pl
from jax.experimental.pallas import tpu as pltpu


def _round_up(x, m):
    return (x + m - 1) // m * m


def _pad_to(a, shape):
    return jnp.pad(a, [(0, t - s) for s, t in zip(a.shape, shape)])


def _pick_bt(B, S):
    """Batch-block size: single grid step for small batches; otherwise aim for
    Bt*S >= 256 MXU rows (v6e/v7x) with Bt % 8 == 0 so the non-full batch
    blocks (x / output) stay (8,128)-legal."""
    if B <= 8 or B * S <= 2048:
        return B
    bt = _round_up(max(8, -(-256 // S)), 8)
    while bt < B and B % bt != 0:
        bt += 8
    return bt if (bt < B and B % bt == 0) else B


def hdn_kernel(x_ref,                       # (Bt, S_pad, E+3) bf16
               w_enc_ref, w_agg_ref, w_pair_ref, w1s_ref, w2_ref,
               bh_ref, b2_ref,
               out_ref,                     # (Bt, 3*C_pad) f32
               *, E, C, C_pad):
    Bt, S, _ = x_ref.shape
    Hp = w_enc_ref.shape[1]
    f32 = jnp.float32
    neg = f32(-jnp.inf)

    # x carries [embedding(E) | token mask | e1-span mask | e2-span mask] in
    # its lane dim -> one streamed per-example input, no (.,S,1) int32 inputs.
    xm = x_ref[...].reshape(Bt * S, E + 3)                     # bf16
    tok_m = xm[:, E:E + 1].astype(f32)                         # (Bt*S, 1)
    sp1_m = xm[:, E + 1:E + 2].astype(f32)
    sp2_m = xm[:, E + 2:E + 3].astype(f32)

    bh = bh_ref[...]                                           # (4, Hp) f32

    # Seq2Seq encoder stand-in (per-token tanh FF), masked like
    # get_text_field_mask(tokens).  w_enc has zero rows for the 3 mask lanes,
    # so the un-sliced xm feeds the MXU directly (K = E+3).
    enc = jnp.tanh(jnp.dot(xm, w_enc_ref[...],
                           preferred_element_type=f32) + bh[0:1, :])
    enc = enc * tok_m                                          # (Bt*S, Hp) f32

    # aggregate = Linear(H * (gcn_num_layers + 1), H) with gcn_num_layers == 0.
    agg = jnp.dot(enc.astype(jnp.bfloat16), w_agg_ref[...],
                  preferred_element_type=f32) + bh[1:2, :]     # (Bt*S, Hp)

    # Span max-pooling, vectorized over the Bt examples of this block.
    # NOTE: empty / reversed spans yield -inf (the PyTorch reference also
    # misbehaves on such inputs).
    e1 = jnp.max(jnp.where(sp1_m > 0.0, agg, neg).reshape(Bt, S, Hp), axis=1)
    e2 = jnp.max(jnp.where(sp2_m > 0.0, agg, neg).reshape(Bt, S, Hp), axis=1)

    # pair_encode: encode stack([e1, e2], dim=1), take the last position; with
    # the per-token feed-forward pair_encoder stand-in that is f(e2).
    pair = jnp.tanh(jnp.dot(e2.astype(jnp.bfloat16), w_pair_ref[...],
                            preferred_element_type=f32) + bh[2:3, :])

    # linear1 over [times, avg, pair_encode, concat, minus], folded into ONE
    # stacked-K matmul: feats = [e1*e2 | pair | e1 | e2] (lane-aligned concat),
    # w1s = [w_t ; w_p ; 0.5*w_a + w_c1 + w_m ; 0.5*w_a + w_c2 - w_m].
    feats = jnp.concatenate([e1 * e2, pair, e1, e2],
                            axis=-1).astype(jnp.bfloat16)      # (Bt, 4*Hp)
    hid = jnp.dot(feats, w1s_ref[...],
                  preferred_element_type=f32) + bh[3:4, :]     # (Bt, Hp)

    logits = jnp.dot(hid.astype(jnp.bfloat16), w2_ref[...],
                     preferred_element_type=f32) + b2_ref[...]  # (Bt, C_pad)

    # softmax / log_softmax over the real C lanes (padded lanes masked);
    # probs = exp(log_probs) so the two outputs are exactly consistent.
    lane = lax.broadcasted_iota(jnp.int32, logits.shape, 1)
    lm = jnp.where(lane < C, logits, f32(-1e30))
    z = lm - jnp.max(lm, axis=-1, keepdims=True)
    logp = z - jnp.log(jnp.sum(jnp.exp(z), axis=-1, keepdims=True))
    probs = jnp.exp(logp)

    out_ref[:, 0 * C_pad:1 * C_pad] = logits
    out_ref[:, 1 * C_pad:2 * C_pad] = probs
    out_ref[:, 2 * C_pad:3 * C_pad] = logp


def hdn_forward(tokens, e1_span, e2_span, params):
    B, S = tokens.shape
    E, H = params["w_enc"].shape
    C = params["w2"].shape[1]
    H_pad = _round_up(H, 128)
    C_pad = _round_up(C, 128)
    S_pad = _round_up(S, 8)          # clean sublane tiling for (Bt,S,Hp) views
    Bt = _pick_bt(B, S_pad)

    # ---- glue: text_field_embedder gather + mask lanes (token / spans) ----
    # TODO(synk): for large vocab / E fuse the gather into the kernel via
    # per-token HBM->VMEM DMA; at these sizes it is cheap wrapper glue.
    emb = jnp.take(params["embedding"], tokens, axis=0)               # (B,S,E)
    tok_m = (tokens != 0).astype(jnp.float32)[..., None]              # (B,S,1)
    pos = jnp.arange(S, dtype=jnp.int32)[None, :]
    sp1 = ((pos >= e1_span[:, :1]) & (pos <= e1_span[:, 1:2]))
    sp2 = ((pos >= e2_span[:, :1]) & (pos <= e2_span[:, 1:2]))
    x_in = jnp.concatenate(
        [emb, tok_m, sp1[..., None].astype(jnp.float32),
         sp2[..., None].astype(jnp.float32)], axis=-1)                # (B,S,E+3)
    x_in = jnp.pad(x_in, ((0, 0), (0, S_pad - S), (0, 0))).astype(jnp.bfloat16)

    # ---- weights: pad to 128 lanes, bf16 MXU operands, fold / stack ----
    bf = jnp.bfloat16
    w_enc = jnp.pad(params["w_enc"],
                    ((0, 3), (0, H_pad - H))).astype(bf)              # (E+3,Hp)
    w_agg = _pad_to(params["w_agg"], (H_pad, H_pad)).astype(bf)
    w_pair = _pad_to(params["w_pair"], (H_pad, H_pad)).astype(bf)
    # linear1 algebraic fold (feature order: times, avg, pair, e1, e2, minus)
    w1 = params["w1"]
    w_t, w_a, w_p, w_c1, w_c2, w_m = (w1[i * H:(i + 1) * H] for i in range(6))
    w_l = 0.5 * w_a + w_c1 + w_m
    w_r = 0.5 * w_a + w_c2 - w_m
    w1s = jnp.concatenate([_pad_to(w, (H_pad, H_pad))
                           for w in (w_t, w_p, w_l, w_r)], axis=0).astype(bf)
    w2 = _pad_to(params["w2"], (H_pad, C_pad)).astype(bf)
    bh = jnp.concatenate([_pad_to(params[k], (1, H_pad))
                          for k in ("b_enc", "b_agg", "b_pair", "b1")], axis=0)
    b2 = _pad_to(params["b2"], (1, C_pad))

    kernel = functools.partial(hdn_kernel, E=E, C=C, C_pad=C_pad)

    def resident(shape):   # weights / biases stay VMEM-resident across the grid
        return pl.BlockSpec(shape, lambda i: (0,) * len(shape))

    grid_spec = pltpu.PrefetchScalarGridSpec(
        num_scalar_prefetch=0,
        grid=(B // Bt,),
        in_specs=[
            pl.BlockSpec((Bt, S_pad, E + 3), lambda i: (i, 0, 0)),   # x
            resident((E + 3, H_pad)),                                # w_enc
            resident((H_pad, H_pad)),                                # w_agg
            resident((H_pad, H_pad)),                                # w_pair
            resident((4 * H_pad, H_pad)),                            # w1 stacked
            resident((H_pad, C_pad)),                                # w2
            resident((4, H_pad)),                                    # biases (H)
            resident((1, C_pad)),                                    # b2
        ],
        out_specs=pl.BlockSpec((Bt, 3 * C_pad), lambda i: (i, 0)),
    )

    # Cost estimate with REAL (unpadded) dims / true streamed bytes.
    flops = 2 * B * (S * (E * H + H * H) + 7 * H * H + H * C)
    transcendentals = B * (S * H + H + 2 * C + 1)
    weight_bytes = sum(int(w.size) * w.dtype.itemsize
                       for w in (w_enc, w_agg, w_pair, w1s, w2, bh, b2))
    bytes_accessed = int(x_in.size) * 2 + weight_bytes + B * 3 * C_pad * 4

    # VMEM budget: resident weights + double-buffered activation blocks,
    # with headroom, capped below v7x's 64 MiB per-TC VMEM.
    in_block_bytes = 2 * Bt * S_pad * (E + 3) * 2
    out_block_bytes = 2 * Bt * 3 * C_pad * 4
    vmem_limit = int(min(48 * 1024 * 1024,
                         max(16 * 1024 * 1024,
                             2 * (weight_bytes + in_block_bytes
                                  + out_block_bytes))))

    packed = pl.pallas_call(
        kernel,
        out_shape=jax.ShapeDtypeStruct((B, 3 * C_pad), jnp.float32),
        grid_spec=grid_spec,
        compiler_params=pltpu.CompilerParams(
            dimension_semantics=("parallel",),       # independent batch blocks
            vmem_limit_bytes=vmem_limit),
        cost_estimate=pl.CostEstimate(
            flops=flops, transcendentals=transcendentals,
            bytes_accessed=bytes_accessed),
    )(x_in, w_enc, w_agg, w_pair, w1s, w2, bh, b2)

    return {"logits": packed[:, 0:C],
            "probs": packed[:, C_pad:C_pad + C],
            "log_probs": packed[:, 2 * C_pad:2 * C_pad + C]}


def hdn_reference(tokens, e1_span, e2_span, params):
    """Pure-JAX f32 reference with identical forward semantics."""
    B, S = tokens.shape
    emb = jnp.take(params["embedding"], tokens, axis=0)
    mask = (tokens != 0).astype(jnp.float32)[..., None]
    enc = jnp.tanh(emb @ params["w_enc"] + params["b_enc"]) * mask
    agg = enc @ params["w_agg"] + params["b_agg"]
    e1_rows, e2_rows = [], []
    for b in range(B):
        e1_rows.append(jnp.max(agg[b, e1_span[b, 0]:e1_span[b, 1] + 1], axis=0))
        e2_rows.append(jnp.max(agg[b, e2_span[b, 0]:e2_span[b, 1] + 1], axis=0))
    e1 = jnp.stack(e1_rows)
    e2 = jnp.stack(e2_rows)
    pair = jnp.tanh(e2 @ params["w_pair"] + params["b_pair"])
    feats = jnp.concatenate([e1 * e2, (e1 + e2) / 2, pair, e1, e2, e1 - e2],
                            axis=-1)
    out = feats @ params["w1"] + params["b1"]
    logits = out @ params["w2"] + params["b2"]
    return logits, jax.nn.softmax(logits, -1), jax.nn.log_softmax(logits, -1)


def init_params(key, vocab_size, E, H, C):
    ks = jax.random.split(key, 7)
    s = 0.1
    return {
        "embedding": s * jax.random.normal(ks[0], (vocab_size, E), jnp.float32),
        "w_enc": s * jax.random.normal(ks[1], (E, H), jnp.float32),
        "b_enc": jnp.zeros((1, H), jnp.float32),
        "w_agg": s * jax.random.normal(ks[2], (H, H), jnp.float32),
        "b_agg": 0.01 * jnp.ones((1, H), jnp.float32),
        "w_pair": s * jax.random.normal(ks[3], (H, H), jnp.float32),
        "b_pair": jnp.zeros((1, H), jnp.float32),
        "w1": s * jax.random.normal(ks[4], (6 * H, H), jnp.float32),
        "b1": 0.01 * jnp.ones((1, H), jnp.float32),
        "w2": s * jax.random.normal(ks[5], (H, C), jnp.float32),
        "b2": jnp.zeros((1, C), jnp.float32),
    }


if __name__ == "__main__":
    B, S, E, H, C, VOCAB = 2, 16, 32, 32, 4, 50
    key = jax.random.PRNGKey(0)
    k_tok, k_par = jax.random.split(key)

    tokens = jax.random.randint(k_tok, (B, S), 1, VOCAB, dtype=jnp.int32)
    tokens = tokens.at[:, 14:].set(0)           # trailing padding -> exercises mask
    e1_span = jnp.array([[1, 3], [2, 5]], dtype=jnp.int32)
    e2_span = jnp.array([[6, 8], [9, 12]], dtype=jnp.int32)
    params = init_params(k_par, VOCAB, E, H, C)

    fwd = jax.jit(hdn_forward)
    out = fwd(tokens, e1_span, e2_span, params)
    jax.block_until_ready(out)

    ref_logits, ref_probs, ref_logp = hdn_reference(tokens, e1_span, e2_span, params)
    # bf16 MXU operands (f32 accumulation) set the tolerance.
    assert np.allclose(np.asarray(out["logits"]), np.asarray(ref_logits),
                       atol=3e-3, rtol=3e-3)
    assert np.allclose(np.asarray(out["probs"]), np.asarray(ref_probs),
                       atol=3e-3, rtol=3e-3)
    assert np.allclose(np.asarray(out["log_probs"]), np.asarray(ref_logp),
                       atol=3e-3, rtol=3e-3)

    print("KERNEL_OK")
</pallas_src>

<mosaic_0001>
module attributes {stable_mosaic.version = 11 : i64} {
  func.func @hdn_kernel(%arg0: i32, %arg1: memref<2x16x35xbf16, #tpu.memory_space<vmem>>, %arg2: memref<35x128xbf16, #tpu.memory_space<vmem>>, %arg3: memref<128x128xbf16, #tpu.memory_space<vmem>>, %arg4: memref<128x128xbf16, #tpu.memory_space<vmem>>, %arg5: memref<512x128xbf16, #tpu.memory_space<vmem>>, %arg6: memref<128x128xbf16, #tpu.memory_space<vmem>>, %arg7: memref<4x128xf32, #tpu.memory_space<vmem>>, %arg8: memref<1x128xf32, #tpu.memory_space<vmem>>, %arg9: memref<2x384xf32, #tpu.memory_space<vmem>>) attributes {dimension_semantics = [#tpu.dimension_semantics<parallel>], iteration_bounds = array<i64: 1>, scalar_prefetch = 0 : i64, scratch_operands = 0 : i64, tpu.core_type = #tpu.core_type<tc>, window_params = [{transform_indices = @transform_0, window_bounds = array<i64: 2, 16, 35>}, {pipeline_mode = #tpu.pipeline_mode<synchronous>, transform_indices = @transform_1, window_bounds = array<i64: 35, 128>}, {pipeline_mode = #tpu.pipeline_mode<synchronous>, transform_indices = @transform_2, window_bounds = array<i64: 128, 128>}, {pipeline_mode = #tpu.pipeline_mode<synchronous>, transform_indices = @transform_3, window_bounds = array<i64: 128, 128>}, {pipeline_mode = #tpu.pipeline_mode<synchronous>, transform_indices = @transform_4, window_bounds = array<i64: 512, 128>}, {pipeline_mode = #tpu.pipeline_mode<synchronous>, transform_indices = @transform_5, window_bounds = array<i64: 128, 128>}, {pipeline_mode = #tpu.pipeline_mode<synchronous>, transform_indices = @transform_6, window_bounds = array<i64: 4, 128>}, {pipeline_mode = #tpu.pipeline_mode<synchronous>, transform_indices = @transform_7, window_bounds = array<i64: 1, 128>}, {transform_indices = @transform_8, window_bounds = array<i64: 2, 384>}]} {
    %c0 = arith.constant 0 : index
    %c0_0 = arith.constant 0 : index
    %c0_1 = arith.constant 0 : index
    %0 = vector.load %arg1[%c0, %c0_0, %c0_1] : memref<2x16x35xbf16, #tpu.memory_space<vmem>>, vector<2x16x35xbf16>
    %1 = vector.shape_cast %0 : vector<2x16x35xbf16> to vector<32x35xbf16>
    %2 = vector.extract_strided_slice %1 {offsets = [0, 32], sizes = [32, 1], strides = [1, 1]} : vector<32x35xbf16> to vector<32x1xbf16>
    %3 = arith.extf %2 : vector<32x1xbf16> to vector<32x1xf32>
    %4 = vector.extract_strided_slice %1 {offsets = [0, 33], sizes = [32, 1], strides = [1, 1]} : vector<32x35xbf16> to vector<32x1xbf16>
    %5 = arith.extf %4 : vector<32x1xbf16> to vector<32x1xf32>
    %6 = vector.extract_strided_slice %1 {offsets = [0, 34], sizes = [32, 1], strides = [1, 1]} : vector<32x35xbf16> to vector<32x1xbf16>
    %7 = arith.extf %6 : vector<32x1xbf16> to vector<32x1xf32>
    %c0_2 = arith.constant 0 : index
    %c0_3 = arith.constant 0 : index
    %8 = vector.load %arg7[%c0_2, %c0_3] : memref<4x128xf32, #tpu.memory_space<vmem>>, vector<4x128xf32>
    %c0_4 = arith.constant 0 : index
    %c0_5 = arith.constant 0 : index
    %9 = vector.load %arg2[%c0_4, %c0_5] : memref<35x128xbf16, #tpu.memory_space<vmem>>, vector<35x128xbf16>
    %cst = arith.constant dense<0.000000e+00> : vector<32x128xf32>
    %10 = tpu.matmul %1, %9, %cst {dimension_numbers = #tpu.dot_dimension_numbers<[1], [0], [0], [1], [0, 0, 1, 1], [], []>} : vector<32x35xbf16>, vector<35x128xbf16>, vector<32x128xf32> -> vector<32x128xf32>
    %11 = vector.extract_strided_slice %8 {offsets = [0, 0], sizes = [1, 128], strides = [1, 1]} : vector<4x128xf32> to vector<1x128xf32>
    %12 = vector.broadcast %11 : vector<1x128xf32> to vector<32x128xf32>
    %13 = arith.addf %10, %12 : vector<32x128xf32>
    %14 = math.tanh %13 : vector<32x128xf32>
    %15 = vector.broadcast %3 : vector<32x1xf32> to vector<32x128xf32>
    %16 = arith.mulf %14, %15 : vector<32x128xf32>
    %17 = arith.truncf %16 : vector<32x128xf32> to vector<32x128xbf16>
    %c0_6 = arith.constant 0 : index
    %c0_7 = arith.constant 0 : index
    %18 = vector.load %arg3[%c0_6, %c0_7] : memref<128x128xbf16, #tpu.memory_space<vmem>>, vector<128x128xbf16>
    %cst_8 = arith.constant dense<0.000000e+00> : vector<32x128xf32>
    %19 = tpu.matmul %17, %18, %cst_8 {dimension_numbers = #tpu.dot_dimension_numbers<[1], [0], [0], [1], [0, 0, 1, 1], [], []>} : vector<32x128xbf16>, vector<128x128xbf16>, vector<32x128xf32> -> vector<32x128xf32>
    %20 = vector.extract_strided_slice %8 {offsets = [1, 0], sizes = [1, 128], strides = [1, 1]} : vector<4x128xf32> to vector<1x128xf32>
    %21 = vector.broadcast %20 : vector<1x128xf32> to vector<32x128xf32>
    %22 = arith.addf %19, %21 : vector<32x128xf32>
    %cst_9 = arith.constant 0.000000e+00 : f32
    %23 = vector.broadcast %cst_9 : f32 to vector<32x1xf32>
    %24 = arith.cmpf ogt, %5, %23 : vector<32x1xf32>
    %cst_10 = arith.constant 0xFF800000 : f32
    %25 = vector.shape_cast %24 : vector<32x1xi1> to vector<32x1xi1>
    %26 = vector.broadcast %25 : vector<32x1xi1> to vector<32x128xi1>
    %27 = vector.broadcast %cst_10 : f32 to vector<32x128xf32>
    %28 = arith.select %26, %22, %27 : vector<32x128xi1>, vector<32x128xf32>
    %29 = vector.shape_cast %28 : vector<32x128xf32> to vector<2x16x128xf32>
    %cst_11 = arith.constant dense<0xFF800000> : vector<2x128xf32>
    %30 = vector.multi_reduction <maximumf>, %29, %cst_11 [1] : vector<2x16x128xf32> to vector<2x128xf32>
    %cst_12 = arith.constant 0.000000e+00 : f32
    %31 = vector.broadcast %cst_12 : f32 to vector<32x1xf32>
    %32 = arith.cmpf ogt, %7, %31 : vector<32x1xf32>
    %cst_13 = arith.constant 0xFF800000 : f32
    %33 = vector.shape_cast %32 : vector<32x1xi1> to vector<32x1xi1>
    %34 = vector.broadcast %33 : vector<32x1xi1> to vector<32x128xi1>
    %35 = vector.broadcast %cst_13 : f32 to vector<32x128xf32>
    %36 = arith.select %34, %22, %35 : vector<32x128xi1>, vector<32x128xf32>
    %37 = vector.shape_cast %36 : vector<32x128xf32> to vector<2x16x128xf32>
    %cst_14 = arith.constant dense<0xFF800000> : vector<2x128xf32>
    %38 = vector.multi_reduction <maximumf>, %37, %cst_14 [1] : vector<2x16x128xf32> to vector<2x128xf32>
    %39 = arith.truncf %38 : vector<2x128xf32> to vector<2x128xbf16>
    %c0_15 = arith.constant 0 : index
    %c0_16 = arith.constant 0 : index
    %40 = vector.load %arg4[%c0_15, %c0_16] : memref<128x128xbf16, #tpu.memory_space<vmem>>, vector<128x128xbf16>
    %cst_17 = arith.constant dense<0.000000e+00> : vector<2x128xf32>
    %41 = tpu.matmul %39, %40, %cst_17 {dimension_numbers = #tpu.dot_dimension_numbers<[1], [0], [0], [1], [0, 0, 1, 1], [], []>} : vector<2x128xbf16>, vector<128x128xbf16>, vector<2x128xf32> -> vector<2x128xf32>
    %42 = vector.extract_strided_slice %8 {offsets = [2, 0], sizes = [1, 128], strides = [1, 1]} : vector<4x128xf32> to vector<1x128xf32>
    %43 = vector.broadcast %42 : vector<1x128xf32> to vector<2x128xf32>
    %44 = arith.addf %41, %43 : vector<2x128xf32>
    %45 = math.tanh %44 : vector<2x128xf32>
    %46 = arith.mulf %30, %38 : vector<2x128xf32>
    %47 = tpu.concatenate %46, %45, %30, %38 in 1 : vector<2x128xf32>, vector<2x128xf32>, vector<2x128xf32>, vector<2x128xf32> -> vector<2x512xf32>
    %48 = arith.truncf %47 : vector<2x512xf32> to vector<2x512xbf16>
    %c0_18 = arith.constant 0 : index
    %c0_19 = arith.constant 0 : index
    %49 = vector.load %arg5[%c0_18, %c0_19] : memref<512x128xbf16, #tpu.memory_space<vmem>>, vector<512x128xbf16>
    %cst_20 = arith.constant dense<0.000000e+00> : vector<2x128xf32>
    %50 = tpu.matmul %48, %49, %cst_20 {dimension_numbers = #tpu.dot_dimension_numbers<[1], [0], [0], [1], [0, 0, 1, 1], [], []>} : vector<2x512xbf16>, vector<512x128xbf16>, vector<2x128xf32> -> vector<2x128xf32>
    %51 = vector.extract_strided_slice %8 {offsets = [3, 0], sizes = [1, 128], strides = [1, 1]} : vector<4x128xf32> to vector<1x128xf32>
    %52 = vector.broadcast %51 : vector<1x128xf32> to vector<2x128xf32>
    %53 = arith.addf %50, %52 : vector<2x128xf32>
    %54 = arith.truncf %53 : vector<2x128xf32> to vector<2x128xbf16>
    %c0_21 = arith.constant 0 : index
    %c0_22 = arith.constant 0 : index
    %55 = vector.load %arg6[%c0_21, %c0_22] : memref<128x128xbf16, #tpu.memory_space<vmem>>, vector<128x128xbf16>
    %cst_23 = arith.constant dense<0.000000e+00> : vector<2x128xf32>
    %56 = tpu.matmul %54, %55, %cst_23 {dimension_numbers = #tpu.dot_dimension_numbers<[1], [0], [0], [1], [0, 0, 1, 1], [], []>} : vector<2x128xbf16>, vector<128x128xbf16>, vector<2x128xf32> -> vector<2x128xf32>
    %c0_24 = arith.constant 0 : index
    %c0_25 = arith.constant 0 : index
    %57 = vector.load %arg8[%c0_24, %c0_25] : memref<1x128xf32, #tpu.memory_space<vmem>>, vector<1x128xf32>
    %58 = vector.broadcast %57 : vector<1x128xf32> to vector<2x128xf32>
    %59 = arith.addf %56, %58 : vector<2x128xf32>
    %60 = tpu.iota {dimensions = array<i32: 1>} : vector<2x128xi32>
    %c4_i32 = arith.constant 4 : i32
    %61 = vector.broadcast %c4_i32 : i32 to vector<2x128xi32>
    %62 = arith.cmpi slt, %60, %61 : vector<2x128xi32>
    %cst_26 = arith.constant -1.000000e+30 : f32
    %63 = vector.broadcast %cst_26 : f32 to vector<2x128xf32>
    %64 = arith.select %62, %59, %63 : vector<2x128xi1>, vector<2x128xf32>
    %cst_27 = arith.constant dense<0xFF800000> : vector<2xf32>
    %65 = vector.multi_reduction <maximumf>, %64, %cst_27 [1] : vector<2x128xf32> to vector<2xf32>
    %66 = vector.shape_cast %65 : vector<2xf32> to vector<2x1xf32>
    %67 = vector.broadcast %66 : vector<2x1xf32> to vector<2x128xf32>
    %68 = arith.subf %64, %67 : vector<2x128xf32>
    %69 = math.exp %68 : vector<2x128xf32>
    %cst_28 = arith.constant dense<0.000000e+00> : vector<2xf32>
    %70 = vector.multi_reduction <add>, %69, %cst_28 [1] : vector<2x128xf32> to vector<2xf32>
    %71 = vector.shape_cast %70 : vector<2xf32> to vector<2x1xf32>
    %72 = math.log %71 : vector<2x1xf32>
    %73 = vector.broadcast %72 : vector<2x1xf32> to vector<2x128xf32>
    %74 = arith.subf %68, %73 : vector<2x128xf32>
    %75 = math.exp %74 : vector<2x128xf32>
    %c0_29 = arith.constant 0 : index
    %c0_30 = arith.constant 0 : index
    %76 = vector.load %arg9[%c0_29, %c0_30] : memref<2x384xf32, #tpu.memory_space<vmem>>, vector<2x128xf32>
    tpu.vector_store %arg9[%c0_29, %c0_30], %59 {strides = array<i32>} : memref<2x384xf32, #tpu.memory_space<vmem>>, vector<2x128xf32>,
    %c0_31 = arith.constant 0 : index
    %c128 = arith.constant 128 : index
    %77 = vector.load %arg9[%c0_31, %c128] : memref<2x384xf32, #tpu.memory_space<vmem>>, vector<2x128xf32>
    tpu.vector_store %arg9[%c0_31, %c128], %75 {strides = array<i32>} : memref<2x384xf32, #tpu.memory_space<vmem>>, vector<2x128xf32>,
    %c0_32 = arith.constant 0 : index
    %c256 = arith.constant 256 : index
    %78 = vector.load %arg9[%c0_32, %c256] : memref<2x384xf32, #tpu.memory_space<vmem>>, vector<2x128xf32>
    tpu.vector_store %arg9[%c0_32, %c256], %74 {strides = array<i32>} : memref<2x384xf32, #tpu.memory_space<vmem>>, vector<2x128xf32>,
    return
  }
  func.func @transform_0(%arg0: i32) -> (i32, i32, i32) {
    %c0_i32 = arith.constant 0 : i32
    %c0_i32_0 = arith.constant 0 : i32
    %c0_i32_1 = arith.constant 0 : i32
    return %arg0, %c0_i32, %c0_i32_0 : i32, i32, i32
  }
  func.func @transform_1(%arg0: i32) -> (i32, i32) {
    %c0_i32 = arith.constant 0 : i32
    %c0_i32_0 = arith.constant 0 : i32
    %c0_i32_1 = arith.constant 0 : i32
    return %c0_i32, %c0_i32_0 : i32, i32
  }
  func.func @transform_2(%arg0: i32) -> (i32, i32) {
    %c0_i32 = arith.constant 0 : i32
    %c0_i32_0 = arith.constant 0 : i32
    %c0_i32_1 = arith.constant 0 : i32
    return %c0_i32, %c0_i32_0 : i32, i32
  }
  func.func @transform_3(%arg0: i32) -> (i32, i32) {
    %c0_i32 = arith.constant 0 : i32
    %c0_i32_0 = arith.constant 0 : i32
    %c0_i32_1 = arith.constant 0 : i32
    return %c0_i32, %c0_i32_0 : i32, i32
  }
  func.func @transform_4(%arg0: i32) -> (i32, i32) {
    %c0_i32 = arith.constant 0 : i32
    %c0_i32_0 = arith.constant 0 : i32
    %c0_i32_1 = arith.constant 0 : i32
    return %c0_i32, %c0_i32_0 : i32, i32
  }
  func.func @transform_5(%arg0: i32) -> (i32, i32) {
    %c0_i32 = arith.constant 0 : i32
    %c0_i32_0 = arith.constant 0 : i32
    %c0_i32_1 = arith.constant 0 : i32
    return %c0_i32, %c0_i32_0 : i32, i32
  }
  func.func @transform_6(%arg0: i32) -> (i32, i32) {
    %c0_i32 = arith.constant 0 : i32
    %c0_i32_0 = arith.constant 0 : i32
    %c0_i32_1 = arith.constant 0 : i32
    return %c0_i32, %c0_i32_0 : i32, i32
  }
  func.func @transform_7(%arg0: i32) -> (i32, i32) {
    %c0_i32 = arith.constant 0 : i32
    %c0_i32_0 = arith.constant 0 : i32
    %c0_i32_1 = arith.constant 0 : i32
    return %c0_i32, %c0_i32_0 : i32, i32
  }
  func.func @transform_8(%arg0: i32) -> (i32, i32) {
    %c0_i32 = arith.constant 0 : i32
    %c0_i32_0 = arith.constant 0 : i32
    return %arg0, %c0_i32 : i32, i32
  }
}

</mosaic_0001>

<llo_original>
// kernel: hdn_forward.1
$region0: #{hdn_forward.1}
  #allocation0 [shape = 'u32[]', space=smem, size = 0x4, offset = 0x4, fixed_abs, tag = 'smem constant byte address 0x4 - core index']
  #allocation1 [shape = 'u32[144,128]{1,0:T(1,128)}', space=vmem, size = 0x12000, scoped, tag = 'internal scratch']
  %s0 = inlined_call_operand.vmem [shape: bf16[2,16,35], index: 0, kind: input, shape index: {}]
  %s1 = inlined_call_operand.vmem [shape: bf16[35,128], index: 1, kind: input, shape index: {}]
  %s2 = inlined_call_operand.vmem [shape: bf16[128,128], index: 2, kind: input, shape index: {}]
  %s3 = inlined_call_operand.vmem [shape: bf16[128,128], index: 3, kind: input, shape index: {}]
  %s4 = inlined_call_operand.vmem [shape: bf16[512,128], index: 4, kind: input, shape index: {}]
  %s5 = inlined_call_operand.vmem [shape: bf16[128,128], index: 5, kind: input, shape index: {}]
  %s6 = inlined_call_operand.vmem [shape: f32[4,128], index: 6, kind: input, shape index: {}]
  %s7 = inlined_call_operand.vmem [shape: f32[1,128], index: 7, kind: input, shape index: {}]
  %s8 = inlined_call_operand.vmem [shape: f32[2,384], index: 8, kind: output, shape index: {}]
  %s9 = sld [smem:[#allocation0]]
  $region42: #{hdn_forward.1} parent=0
    _
  %s11 = ssub.s32 1, %s9
  %s12 = scalar_select 0, %s11, %s9
  // Predicated region
  $region2: #{hdn_forward.1} parent=0 // pred_check
    _
  $region3: #{hdn_forward.1} parent=0 // pred_check_branch
    %14 = sbr.rel (0) target = $region5
  $region4: #{hdn_forward.1} parent=0 // pred_region
    _
  $region5: #{hdn_forward.1} parent=0 // pred_fallthru
    _
  // Predicated region
  $region6: #{hdn_forward.1} parent=0 // pred_check
    _
  $region7: #{hdn_forward.1} parent=0 // pred_check_branch
    %16 = sbr.rel (0) target = $region9
  $region8: #{hdn_forward.1} parent=0 // pred_region
    _
  $region9: #{hdn_forward.1} parent=0 // pred_fallthru
    _
  // Predicated region
  $region10: #{hdn_forward.1} parent=0 // pred_check
    _
  $region11: #{hdn_forward.1} parent=0 // pred_check_branch
    %18 = sbr.rel (0) target = $region13
  $region12: #{hdn_forward.1} parent=0 // pred_region
    _
  $region13: #{hdn_forward.1} parent=0 // pred_fallthru
    _
  // Predicated region
  $region14: #{hdn_forward.1} parent=0 // pred_check
    _
  $region15: #{hdn_forward.1} parent=0 // pred_check_branch
    %20 = sbr.rel (0) target = $region17
  $region16: #{hdn_forward.1} parent=0 // pred_region
    _
  $region17: #{hdn_forward.1} parent=0 // pred_fallthru
    _
  // Predicated region
  $region18: #{hdn_forward.1} parent=0 // pred_check
    _
  $region19: #{hdn_forward.1} parent=0 // pred_check_branch
    %22 = sbr.rel (0) target = $region21
  $region20: #{hdn_forward.1} parent=0 // pred_region
    _
  $region21: #{hdn_forward.1} parent=0 // pred_fallthru
    _
  // Predicated region
  $region22: #{hdn_forward.1} parent=0 // pred_check
    _
  $region23: #{hdn_forward.1} parent=0 // pred_check_branch
    %24 = sbr.rel (0) target = $region25
  $region24: #{hdn_forward.1} parent=0 // pred_region
    _
  $region25: #{hdn_forward.1} parent=0 // pred_fallthru
    _
  // Predicated region
  $region26: #{hdn_forward.1} parent=0 // pred_check
    _
  $region27: #{hdn_forward.1} parent=0 // pred_check_branch
    %26 = sbr.rel (0) target = $region29
  $region28: #{hdn_forward.1} parent=0 // pred_region
    _
  $region29: #{hdn_forward.1} parent=0 // pred_fallthru
    _
  // Predicated region
  $region30: #{hdn_forward.1} parent=0 // pred_check
    _
  $region31: #{hdn_forward.1} parent=0 // pred_check_branch
    %28 = sbr.rel (0) target = $region33
  $region32: #{hdn_forward.1} parent=0 // pred_region
    _
  $region33: #{hdn_forward.1} parent=0 // pred_fallthru
    _
  %v30 = vld [vmem:[%s0] sm:$0xf]
  %v31 = vld [vmem:[%s0 + $0x4] sm:$0xf]
  %v32 = vld [vmem:[%s0 + $0x8] sm:$0xf]
  %v33 = vld [vmem:[%s0 + $0xc] sm:$0xf]
  %v34 = vunpack.c.l.bf16 %v30
  %v35 = vunpack.c.l.bf16 %v31
  %v36 = vunpack.c.l.bf16 %v32
  %v37 = vunpack.c.l.bf16 %v33
  %v38 = vld [vmem:[%s6] sm:$0xf]
  %v39 = vld [vmem:[%s1] sm:$0xf]
  %v40 = vld [vmem:[%s1 + $0x4] sm:$0xf]
  %v41 = vld [vmem:[%s1 + $0x8] sm:$0xf]
  %v42 = vld [vmem:[%s1 + $0xc] sm:$0xf]
  %v43 = vld [vmem:[%s1 + $0x10] sm:$0x3]
  %v44 = vlaneseq
  %v45 = vshrl.u32 %v44, 7
  %v46 = vsub.s32 0, %v45
  %v47 = vrot.slane %v38, %v46
  %v52 = vunpack.c.l.b16 %v30
  %v53 = vunpack.c.l.b16 %v31
  %v54 = vunpack.c.l.b16 %v32
  %v55 = vunpack.c.l.b16 %v33
  %v56 = vpack.c.b16 %v53, %v52
  %v57 = vpack.c.b16 %v55, %v54
  %v63 = vunpack.c.l.b16 %v39
  %v64 = vunpack.c.l.b16 %v40
  %v65 = vunpack.c.l.b16 %v41
  %v66 = vunpack.c.l.b16 %v42
  %v67 = vunpack.c.l.b16 %v43
  %v68 = vpack.c.b16 %v64, %v63
  %v69 = vpack.c.b16 %v66, %v65
  %v70 = vpack.c.b16 %v67, %v67
  %vm73 = vcmask 285696
  %v75 = vsel %vm73, %v56, 0
  %v78 = vsel %vm73, %v57, 0
  %vm80 = vcmask 1040384
  %vm81 = vcmask 1041408
  %v82 = vsel %vm80, 4294967295, 65535
  %v83 = vsel %vm81, %v82, 0
  %v85 = vand.u32 %v70, %v83
  %87 = vmatprep.subr.bf16.mxu0 0
  %88 = vmatpush1.bf16.msra.mxu0 %v68
  %89 = vmatprep.subr.bf16.mxu0 0
  %90 = vmatpush1.bf16.msra.mxu0 %v69
  %91 = vmatprep.subr.bf16.mxu0 0
  %92 = vmatpush1.bf16.msra.mxu0 %v85
  %93 = vmatprep.subr.bf16.mxu0 0
  %94 = vmatpush1.bf16.msra.mxu0 0
  %95 = vmatprep.subr.bf16.mxu0 0
  %96 = vmatpush1.bf16.msra.mxu0 0
  %97 = vmatprep.subr.bf16.mxu0 0
  %98 = vmatpush1.bf16.msra.mxu0 0
  %99 = vmatprep.subr.bf16.mxu0 0
  %100 = vmatpush1.bf16.msra.mxu0 0
  %101 = vmatprep.subr.bf16.mxu0 0
  %102 = vmatpush1.bf16.msra.mxu0 0
  %103 = vmatprep.subr.bf16.mxu0 0
  %104 = vmatpush1.bf16.msra.mxu0 0
  %105 = vmatprep.subr.bf16.mxu0 0
  %106 = vmatpush1.bf16.msra.mxu0 0
  %107 = vmatprep.subr.bf16.mxu0 0
  %108 = vmatpush1.bf16.msra.mxu0 0
  %109 = vmatprep.subr.bf16.mxu0 0
  %110 = vmatpush1.bf16.msra.mxu0 0
  %111 = vmatprep.subr.bf16.mxu0 0
  %112 = vmatpush1.bf16.msra.mxu0 0
  %113 = vmatprep.subr.bf16.mxu0 0
  %114 = vmatpush1.bf16.msra.mxu0 0
  %115 = vmatprep.subr.bf16.mxu0 0
  %116 = vmatpush1.bf16.msra.mxu0 0
  %117 = vmatprep.subr.bf16.mxu0 0
  %118 = vmatpush1.bf16.msra.mxu0 0
  %119 = vmatprep.mubr.bf16.mxu0 0
  %120 = vmatmul.mubr.bf16.gmra.mrb[0].mxu0 %v75
  %v121 = vpop.f32.mrb[0].mxu0
  %v122 = vadd.f32 %v47, %v121
  %v123 = vpop.f32.mrb[0].mxu0
  %v124 = vpop.f32.mrb[0].mxu0
  %v125 = vadd.f32 %v47, %v124
  %v126 = vpop.f32.mrb[0].mxu0
  %127 = vmatprep.mubr.bf16.mxu0 0
  %128 = vmatmul.mubr.bf16.gmra.mrb[0].mxu0 %v78
  %v129 = vpop.f32.mrb[0].mxu0
  %v130 = vadd.f32 %v47, %v129
  %v131 = vpop.f32.mrb[0].mxu0
  %v132 = vpop.f32.mrb[0].mxu0
  %v133 = vadd.f32 %v47, %v132
  %v134 = vpop.f32.mrb[0].mxu0
  %135 = vdwg.mxu0
  %v136 = vtanh.pop %v122
  %v137 = vtanh.pop %v125
  %v138 = vtanh.pop %v130
  %v139 = vtanh.pop %v133
  %141 = vset.pattern.permute.xlu0 32
  %142 = vperm.xlu0 %141, %v34
  %v143 = vpop.permute.xlu0 %142
  %146 = vset.pattern.permute.xlu0 32
  %147 = vperm.xlu0 %146, %v35
  %v148 = vpop.permute.xlu0 %147
  %151 = vset.pattern.permute.xlu0 32
  %152 = vperm.xlu0 %151, %v36
  %v153 = vpop.permute.xlu0 %152
  %156 = vset.pattern.permute.xlu0 32
  %157 = vperm.xlu0 %156, %v37
  %v158 = vpop.permute.xlu0 %157
  %v160 = vmul.f32 %v136, %v143
  %v161 = vmul.f32 %v137, %v148
  %v162 = vmul.f32 %v138, %v153
  %v163 = vmul.f32 %v139, %v158
  %v164 = vpack.c.bf16 %v161, %v160
  %v165 = vpack.c.bf16 %v163, %v162
  %v166 = vld [vmem:[%s2] sm:$0xf]
  %v167 = vld [vmem:[%s2 + $0x4] sm:$0xf]
  %v168 = vld [vmem:[%s2 + $0x8] sm:$0xf]
  %v169 = vld [vmem:[%s2 + $0xc] sm:$0xf]
  %v170 = vld [vmem:[%s2 + $0x10] sm:$0xf]
  %v171 = vld [vmem:[%s2 + $0x14] sm:$0xf]
  %v172 = vld [vmem:[%s2 + $0x18] sm:$0xf]
  %v173 = vld [vmem:[%s2 + $0x1c] sm:$0xf]
  %v174 = vld [vmem:[%s2 + $0x20] sm:$0xf]
  %v175 = vld [vmem:[%s2 + $0x24] sm:$0xf]
  %v176 = vld [vmem:[%s2 + $0x28] sm:$0xf]
  %v177 = vld [vmem:[%s2 + $0x2c] sm:$0xf]
  %v178 = vld [vmem:[%s2 + $0x30] sm:$0xf]
  %v179 = vld [vmem:[%s2 + $0x34] sm:$0xf]
  %v180 = vld [vmem:[%s2 + $0x38] sm:$0xf]
  %v181 = vld [vmem:[%s2 + $0x3c] sm:$0xf]
  %v182 = vlaneseq
  %v183 = vshrl.u32 %v182, 7
  %v184 = vsub.s32 1, %v183
  %v185 = vrot.slane %v38, %v184
  %v202 = vunpack.c.l.b16 %v166
  %v203 = vunpack.c.l.b16 %v167
  %v204 = vunpack.c.l.b16 %v168
  %v205 = vunpack.c.l.b16 %v169
  %v206 = vunpack.c.l.b16 %v170
  %v207 = vunpack.c.l.b16 %v171
  %v208 = vunpack.c.l.b16 %v172
  %v209 = vunpack.c.l.b16 %v173
  %v210 = vunpack.c.l.b16 %v174
  %v211 = vunpack.c.l.b16 %v175
  %v212 = vunpack.c.l.b16 %v176
  %v213 = vunpack.c.l.b16 %v177
  %v214 = vunpack.c.l.b16 %v178
  %v215 = vunpack.c.l.b16 %v179
  %v216 = vunpack.c.l.b16 %v180
  %v217 = vunpack.c.l.b16 %v181
  %v218 = vpack.c.b16 %v203, %v202
  %v219 = vpack.c.b16 %v205, %v204
  %v220 = vpack.c.b16 %v207, %v206
  %v221 = vpack.c.b16 %v209, %v208
  %v222 = vpack.c.b16 %v211, %v210
  %v223 = vpack.c.b16 %v213, %v212
  %v224 = vpack.c.b16 %v215, %v214
  %v225 = vpack.c.b16 %v217, %v216
  %234 = vmatprep.subr.bf16.mxu0 0
  %235 = vmatpush1.bf16.msra.mxu0 %v218
  %236 = vmatprep.subr.bf16.mxu0 0
  %237 = vmatpush1.bf16.msra.mxu0 %v219
  %238 = vmatprep.subr.bf16.mxu0 0
  %239 = vmatpush1.bf16.msra.mxu0 %v220
  %240 = vmatprep.subr.bf16.mxu0 0
  %241 = vmatpush1.bf16.msra.mxu0 %v221
  %242 = vmatprep.subr.bf16.mxu0 0
  %243 = vmatpush1.bf16.msra.mxu0 %v222
  %244 = vmatprep.subr.bf16.mxu0 0
  %245 = vmatpush1.bf16.msra.mxu0 %v223
  %246 = vmatprep.subr.bf16.mxu0 0
  %247 = vmatpush1.bf16.msra.mxu0 %v224
  %248 = vmatprep.subr.bf16.mxu0 0
  %249 = vmatpush1.bf16.msra.mxu0 %v225
  %250 = vmatprep.subr.bf16.mxu0 0
  %251 = vmatpush1.bf16.msra.mxu0 0
  %252 = vmatprep.subr.bf16.mxu0 0
  %253 = vmatpush1.bf16.msra.mxu0 0
  %254 = vmatprep.subr.bf16.mxu0 0
  %255 = vmatpush1.bf16.msra.mxu0 0
  %256 = vmatprep.subr.bf16.mxu0 0
  %257 = vmatpush1.bf16.msra.mxu0 0
  %258 = vmatprep.subr.bf16.mxu0 0
  %259 = vmatpush1.bf16.msra.mxu0 0
  %260 = vmatprep.subr.bf16.mxu0 0
  %261 = vmatpush1.bf16.msra.mxu0 0
  %262 = vmatprep.subr.bf16.mxu0 0
  %263 = vmatpush1.bf16.msra.mxu0 0
  %264 = vmatprep.subr.bf16.mxu0 0
  %265 = vmatpush1.bf16.msra.mxu0 0
  %266 = vmatprep.mubr.bf16.mxu0 0
  %267 = vmatmul.mubr.bf16.gmra.mrb[0].mxu0 %v164
  %v268 = vpop.f32.mrb[0].mxu0
  %v269 = vadd.f32 %v185, %v268
  %v270 = vpop.f32.mrb[0].mxu0
  %v271 = vpop.f32.mrb[0].mxu0
  %v272 = vadd.f32 %v185, %v271
  %v273 = vpop.f32.mrb[0].mxu0
  %274 = vmatprep.mubr.bf16.mxu0 0
  %275 = vmatmul.mubr.bf16.gmra.mrb[0].mxu0 %v165
  %v276 = vpop.f32.mrb[0].mxu0
  %v277 = vadd.f32 %v185, %v276
  %v278 = vpop.f32.mrb[0].mxu0
  %v279 = vpop.f32.mrb[0].mxu0
  %v280 = vadd.f32 %v185, %v279
  %v281 = vpop.f32.mrb[0].mxu0
  %282 = vdwg.mxu0
  %vm283 = vcmp.gt.f32.partialorder %v34, 0.0
  %vm284 = vcmp.gt.f32.partialorder %v35, 0.0
  %vm285 = vcmp.gt.f32.partialorder %v36, 0.0
  %vm286 = vcmp.gt.f32.partialorder %v37, 0.0
  %v287 = vsel %vm283, 1, 0
  %v288 = vsel %vm284, 1, 0
  %v289 = vsel %vm285, 1, 0
  %v290 = vsel %vm286, 1, 0
  %291 = vset.pattern.permute.xlu0 33
  %292 = vperm.xlu0 %291, %v287
  %v293 = vpop.permute.xlu0 %292
  %294 = vset.pattern.permute.xlu0 33
  %295 = vperm.xlu0 %294, %v288
  %v296 = vpop.permute.xlu0 %295
  %297 = vset.pattern.permute.xlu0 33
  %298 = vperm.xlu0 %297, %v289
  %v299 = vpop.permute.xlu0 %298
  %300 = vset.pattern.permute.xlu0 33
  %301 = vperm.xlu0 %300, %v290
  %v302 = vpop.permute.xlu0 %301
  %vm303 = vcmp.eq.s32.totalorder %v293, 1
  %vm304 = vcmp.eq.s32.totalorder %v296, 1
  %vm305 = vcmp.eq.s32.totalorder %v299, 1
  %vm306 = vcmp.eq.s32.totalorder %v302, 1
  %v307 = vsel %vm303, %v269, -inf
  %v308 = vsel %vm304, %v272, -inf
  %v309 = vsel %vm305, %v277, -inf
  %v310 = vsel %vm306, %v280, -inf
  %v311 = vmax.f32 %v307, %v308
  %v312 = vrot.slane %v311, 4
  %v313 = vmax.f32 %v311, %v312
  %v314 = vrot.slane %v313, 2
  %v315 = vmax.f32 %v313, %v314
  %v316 = vrot.slane %v315, 1
  %v317 = vmax.f32 %v315, %v316
  %v318 = vmax.f32 %v309, %v310
  %v319 = vrot.slane %v318, 4
  %v320 = vmax.f32 %v318, %v319
  %v321 = vrot.slane %v320, 2
  %v322 = vmax.f32 %v320, %v321
  %v323 = vrot.slane %v322, 1
  %v324 = vmax.f32 %v322, %v323
  %325 = vset.pattern.permute.xlu0 34
  %326 = vperm.xlu0 %325, %v287
  %v327 = vpop.permute.xlu0 %326
  %328 = vset.pattern.permute.xlu0 34
  %329 = vperm.xlu0 %328, %v288
  %v330 = vpop.permute.xlu0 %329
  %331 = vset.pattern.permute.xlu0 34
  %332 = vperm.xlu0 %331, %v289
  %v333 = vpop.permute.xlu0 %332
  %334 = vset.pattern.permute.xlu0 34
  %335 = vperm.xlu0 %334, %v290
  %v336 = vpop.permute.xlu0 %335
  %vm337 = vcmp.eq.s32.totalorder %v327, 1
  %vm338 = vcmp.eq.s32.totalorder %v330, 1
  %vm339 = vcmp.eq.s32.totalorder %v333, 1
  %vm340 = vcmp.eq.s32.totalorder %v336, 1
  %v341 = vsel %vm337, %v269, -inf
  %v342 = vsel %vm338, %v272, -inf
  %v343 = vsel %vm339, %v277, -inf
  %v344 = vsel %vm340, %v280, -inf
  %v345 = vmax.f32 %v341, %v342
  %v346 = vrot.slane %v345, 4
  %v347 = vmax.f32 %v345, %v346
  %v348 = vrot.slane %v347, 2
  %v349 = vmax.f32 %v347, %v348
  %v350 = vrot.slane %v349, 1
  %v351 = vmax.f32 %v349, %v350
  %v352 = vmax.f32 %v343, %v344
  %v353 = vrot.slane %v352, 4
  %v354 = vmax.f32 %v352, %v353
  %v355 = vrot.slane %v354, 2
  %v356 = vmax.f32 %v354, %v355
  %v357 = vrot.slane %v356, 1
  %v358 = vmax.f32 %v356, %v357
  %v359 = vpack.c.bf16 %v351, %v351
  %v360 = vpack.c.bf16 %v358, %v358
  %v361 = vld [vmem:[%s3] sm:$0xf]
  %v362 = vld [vmem:[%s3 + $0x4] sm:$0xf]
  %v363 = vld [vmem:[%s3 + $0x8] sm:$0xf]
  %v364 = vld [vmem:[%s3 + $0xc] sm:$0xf]
  %v365 = vld [vmem:[%s3 + $0x10] sm:$0xf]
  %v366 = vld [vmem:[%s3 + $0x14] sm:$0xf]
  %v367 = vld [vmem:[%s3 + $0x18] sm:$0xf]
  %v368 = vld [vmem:[%s3 + $0x1c] sm:$0xf]
  %v369 = vld [vmem:[%s3 + $0x20] sm:$0xf]
  %v370 = vld [vmem:[%s3 + $0x24] sm:$0xf]
  %v371 = vld [vmem:[%s3 + $0x28] sm:$0xf]
  %v372 = vld [vmem:[%s3 + $0x2c] sm:$0xf]
  %v373 = vld [vmem:[%s3 + $0x30] sm:$0xf]
  %v374 = vld [vmem:[%s3 + $0x34] sm:$0xf]
  %v375 = vld [vmem:[%s3 + $0x38] sm:$0xf]
  %v376 = vld [vmem:[%s3 + $0x3c] sm:$0xf]
  %v377 = vlaneseq
  %v378 = vshrl.u32 %v377, 7
  %v379 = vsub.s32 2, %v378
  %v380 = vrot.slane %v38, %v379
  %v383 = vunpack.c.l.b16 %v359
  %v384 = vunpack.c.l.b16 %v360
  %vm385 = vcmask 1041409
  %v386 = vsel %vm385, %v384, %v383
  %v387 = vpack.c.b16 %v386, %v386
  %v405 = vunpack.c.l.b16 %v361
  %v406 = vunpack.c.l.b16 %v362
  %v407 = vunpack.c.l.b16 %v363
  %v408 = vunpack.c.l.b16 %v364
  %v409 = vunpack.c.l.b16 %v365
  %v410 = vunpack.c.l.b16 %v366
  %v411 = vunpack.c.l.b16 %v367
  %v412 = vunpack.c.l.b16 %v368
  %v413 = vunpack.c.l.b16 %v369
  %v414 = vunpack.c.l.b16 %v370
  %v415 = vunpack.c.l.b16 %v371
  %v416 = vunpack.c.l.b16 %v372
  %v417 = vunpack.c.l.b16 %v373
  %v418 = vunpack.c.l.b16 %v374
  %v419 = vunpack.c.l.b16 %v375
  %v420 = vunpack.c.l.b16 %v376
  %v421 = vpack.c.b16 %v406, %v405
  %v422 = vpack.c.b16 %v408, %v407
  %v423 = vpack.c.b16 %v410, %v409
  %v424 = vpack.c.b16 %v412, %v411
  %v425 = vpack.c.b16 %v414, %v413
  %v426 = vpack.c.b16 %v416, %v415
  %v427 = vpack.c.b16 %v418, %v417
  %v428 = vpack.c.b16 %v420, %v419
  %437 = vmatprep.subr.bf16.mxu0 0
  %438 = vmatpush1.bf16.msra.mxu0 %v421
  %439 = vmatprep.subr.bf16.mxu0 0
  %440 = vmatpush1.bf16.msra.mxu0 %v422
  %441 = vmatprep.subr.bf16.mxu0 0
  %442 = vmatpush1.bf16.msra.mxu0 %v423
  %443 = vmatprep.subr.bf16.mxu0 0
  %444 = vmatpush1.bf16.msra.mxu0 %v424
  %445 = vmatprep.subr.bf16.mxu0 0
  %446 = vmatpush1.bf16.msra.mxu0 %v425
  %447 = vmatprep.subr.bf16.mxu0 0
  %448 = vmatpush1.bf16.msra.mxu0 %v426
  %449 = vmatprep.subr.bf16.mxu0 0
  %450 = vmatpush1.bf16.msra.mxu0 %v427
  %451 = vmatprep.subr.bf16.mxu0 0
  %452 = vmatpush1.bf16.msra.mxu0 %v428
  %453 = vmatprep.subr.bf16.mxu0 0
  %454 = vmatpush1.bf16.msra.mxu0 0
  %455 = vmatprep.subr.bf16.mxu0 0
  %456 = vmatpush1.bf16.msra.mxu0 0
  %457 = vmatprep.subr.bf16.mxu0 0
  %458 = vmatpush1.bf16.msra.mxu0 0
  %459 = vmatprep.subr.bf16.mxu0 0
  %460 = vmatpush1.bf16.msra.mxu0 0
  %461 = vmatprep.subr.bf16.mxu0 0
  %462 = vmatpush1.bf16.msra.mxu0 0
  %463 = vmatprep.subr.bf16.mxu0 0
  %464 = vmatpush1.bf16.msra.mxu0 0
  %465 = vmatprep.subr.bf16.mxu0 0
  %466 = vmatpush1.bf16.msra.mxu0 0
  %467 = vmatprep.subr.bf16.mxu0 0
  %468 = vmatpush1.bf16.msra.mxu0 0
  %469 = vmatprep.mubr.bf16.mxu0 0
  %470 = vmatmul.mubr.bf16.gmra.mrb[0].mxu0 %v387
  %v471 = vpop.f32.mrb[0].mxu0
  %v472 = vadd.f32 %v380, %v471
  %v473 = vpop.f32.mrb[0].mxu0
  %v474 = vpop.f32.mrb[0].mxu0
  %v475 = vpop.f32.mrb[0].mxu0
  %476 = vdwg.mxu0
  %v477 = vtanh.pop %v472
  %v478 = vmul.f32 %v317, %v351
  %v479 = vmul.f32 %v324, %v358
  %v482 = vsel %vm385, %v479, %v478
  %v486 = vsel %vm385, %v324, %v317
  %v490 = vsel %vm385, %v358, %v351
  %v492 = vpack.c.bf16 %v482, %v482
  %v493 = vpack.c.bf16 %v477, %v477
  %v494 = vpack.c.bf16 %v486, %v486
  %v495 = vpack.c.bf16 %v490, %v490
  %v496 = vld [vmem:[%s4] sm:$0xf]
  %v497 = vld [vmem:[%s4 + $0x4] sm:$0xf]
  %v498 = vld [vmem:[%s4 + $0x8] sm:$0xf]
  %v499 = vld [vmem:[%s4 + $0xc] sm:$0xf]
  %v500 = vld [vmem:[%s4 + $0x10] sm:$0xf]
  %v501 = vld [vmem:[%s4 + $0x14] sm:$0xf]
  %v502 = vld [vmem:[%s4 + $0x18] sm:$0xf]
  %v503 = vld [vmem:[%s4 + $0x1c] sm:$0xf]
  %v504 = vld [vmem:[%s4 + $0x20] sm:$0xf]
  %v505 = vld [vmem:[%s4 + $0x24] sm:$0xf]
  %v506 = vld [vmem:[%s4 + $0x28] sm:$0xf]
  %v507 = vld [vmem:[%s4 + $0x2c] sm:$0xf]
  %v508 = vld [vmem:[%s4 + $0x30] sm:$0xf]
  %v509 = vld [vmem:[%s4 + $0x34] sm:$0xf]
  %v510 = vld [vmem:[%s4 + $0x38] sm:$0xf]
  %v511 = vld [vmem:[%s4 + $0x3c] sm:$0xf]
  %v512 = vld [vmem:[%s4 + $0x40] sm:$0xf]
  %v513 = vld [vmem:[%s4 + $0x44] sm:$0xf]
  %v514 = vld [vmem:[%s4 + $0x48] sm:$0xf]
  %v515 = vld [vmem:[%s4 + $0x4c] sm:$0xf]
  %v516 = vld [vmem:[%s4 + $0x50] sm:$0xf]
  %v517 = vld [vmem:[%s4 + $0x54] sm:$0xf]
  %v518 = vld [vmem:[%s4 + $0x58] sm:$0xf]
  %v519 = vld [vmem:[%s4 + $0x5c] sm:$0xf]
  %v520 = vld [vmem:[%s4 + $0x60] sm:$0xf]
  %v521 = vld [vmem:[%s4 + $0x64] sm:$0xf]
  %v522 = vld [vmem:[%s4 + $0x68] sm:$0xf]
  %v523 = vld [vmem:[%s4 + $0x6c] sm:$0xf]
  %v524 = vld [vmem:[%s4 + $0x70] sm:$0xf]
  %v525 = vld [vmem:[%s4 + $0x74] sm:$0xf]
  %v526 = vld [vmem:[%s4 + $0x78] sm:$0xf]
  %v527 = vld [vmem:[%s4 + $0x7c] sm:$0xf]
  %v528 = vld [vmem:[%s4 + $0x80] sm:$0xf]
  %v529 = vld [vmem:[%s4 + $0x84] sm:$0xf]
  %v530 = vld [vmem:[%s4 + $0x88] sm:$0xf]
  %v531 = vld [vmem:[%s4 + $0x8c] sm:$0xf]
  %v532 = vld [vmem:[%s4 + $0x90] sm:$0xf]
  %v533 = vld [vmem:[%s4 + $0x94] sm:$0xf]
  %v534 = vld [vmem:[%s4 + $0x98] sm:$0xf]
  %v535 = vld [vmem:[%s4 + $0x9c] sm:$0xf]
  %v536 = vld [vmem:[%s4 + $0xa0] sm:$0xf]
  %v537 = vld [vmem:[%s4 + $0xa4] sm:$0xf]
  %v538 = vld [vmem:[%s4 + $0xa8] sm:$0xf]
  %v539 = vld [vmem:[%s4 + $0xac] sm:$0xf]
  %v540 = vld [vmem:[%s4 + $0xb0] sm:$0xf]
  %v541 = vld [vmem:[%s4 + $0xb4] sm:$0xf]
  %v542 = vld [vmem:[%s4 + $0xb8] sm:$0xf]
  %v543 = vld [vmem:[%s4 + $0xbc] sm:$0xf]
  %v544 = vld [vmem:[%s4 + $0xc0] sm:$0xf]
  %v545 = vld [vmem:[%s4 + $0xc4] sm:$0xf]
  %v546 = vld [vmem:[%s4 + $0xc8] sm:$0xf]
  %v547 = vld [vmem:[%s4 + $0xcc] sm:$0xf]
  %v548 = vld [vmem:[%s4 + $0xd0] sm:$0xf]
  %v549 = vld [vmem:[%s4 + $0xd4] sm:$0xf]
  %v550 = vld [vmem:[%s4 + $0xd8] sm:$0xf]
  %v551 = vld [vmem:[%s4 + $0xdc] sm:$0xf]
  %v552 = vld [vmem:[%s4 + $0xe0] sm:$0xf]
  %v553 = vld [vmem:[%s4 + $0xe4] sm:$0xf]
  %v554 = vld [vmem:[%s4 + $0xe8] sm:$0xf]
  %v555 = vld [vmem:[%s4 + $0xec] sm:$0xf]
  %v556 = vld [vmem:[%s4 + $0xf0] sm:$0xf]
  %v557 = vld [vmem:[%s4 + $0xf4] sm:$0xf]
  %v558 = vld [vmem:[%s4 + $0xf8] sm:$0xf]
  %v559 = vld [vmem:[%s4 + $0xfc] sm:$0xf]
  %v560 = vlaneseq
  %v561 = vshrl.u32 %v560, 7
  %v562 = vsub.s32 3, %v561
  %v563 = vrot.slane %v38, %v562
  %v628 = vunpack.c.l.b16 %v496
  %v629 = vunpack.c.l.b16 %v497
  %v630 = vunpack.c.l.b16 %v498
  %v631 = vunpack.c.l.b16 %v499
  %v632 = vunpack.c.l.b16 %v500
  %v633 = vunpack.c.l.b16 %v501
  %v634 = vunpack.c.l.b16 %v502
  %v635 = vunpack.c.l.b16 %v503
  %v636 = vunpack.c.l.b16 %v504
  %v637 = vunpack.c.l.b16 %v505
  %v638 = vunpack.c.l.b16 %v506
  %v639 = vunpack.c.l.b16 %v507
  %v640 = vunpack.c.l.b16 %v508
  %v641 = vunpack.c.l.b16 %v509
  %v642 = vunpack.c.l.b16 %v510
  %v643 = vunpack.c.l.b16 %v511
  %v644 = vunpack.c.l.b16 %v512
  %v645 = vunpack.c.l.b16 %v513
  %v646 = vunpack.c.l.b16 %v514
  %v647 = vunpack.c.l.b16 %v515
  %v648 = vunpack.c.l.b16 %v516
  %v649 = vunpack.c.l.b16 %v517
  %v650 = vunpack.c.l.b16 %v518
  %v651 = vunpack.c.l.b16 %v519
  %v652 = vunpack.c.l.b16 %v520
  %v653 = vunpack.c.l.b16 %v521
  %v654 = vunpack.c.l.b16 %v522
  %v655 = vunpack.c.l.b16 %v523
  %v656 = vunpack.c.l.b16 %v524
  %v657 = vunpack.c.l.b16 %v525
  %v658 = vunpack.c.l.b16 %v526
  %v659 = vunpack.c.l.b16 %v527
  %v660 = vunpack.c.l.b16 %v528
  %v661 = vunpack.c.l.b16 %v529
  %v662 = vunpack.c.l.b16 %v530
  %v663 = vunpack.c.l.b16 %v531
  %v664 = vunpack.c.l.b16 %v532
  %v665 = vunpack.c.l.b16 %v533
  %v666 = vunpack.c.l.b16 %v534
  %v667 = vunpack.c.l.b16 %v535
  %v668 = vunpack.c.l.b16 %v536
  %v669 = vunpack.c.l.b16 %v537
  %v670 = vunpack.c.l.b16 %v538
  %v671 = vunpack.c.l.b16 %v539
  %v672 = vunpack.c.l.b16 %v540
  %v673 = vunpack.c.l.b16 %v541
  %v674 = vunpack.c.l.b16 %v542
  %v675 = vunpack.c.l.b16 %v543
  %v676 = vunpack.c.l.b16 %v544
  %v677 = vunpack.c.l.b16 %v545
  %v678 = vunpack.c.l.b16 %v546
  %v679 = vunpack.c.l.b16 %v547
  %v680 = vunpack.c.l.b16 %v548
  %v681 = vunpack.c.l.b16 %v549
  %v682 = vunpack.c.l.b16 %v550
  %v683 = vunpack.c.l.b16 %v551
  %v684 = vunpack.c.l.b16 %v552
  %v685 = vunpack.c.l.b16 %v553
  %v686 = vunpack.c.l.b16 %v554
  %v687 = vunpack.c.l.b16 %v555
  %v688 = vunpack.c.l.b16 %v556
  %v689 = vunpack.c.l.b16 %v557
  %v690 = vunpack.c.l.b16 %v558
  %v691 = vunpack.c.l.b16 %v559
  %v692 = vpack.c.b16 %v629, %v628
  %v693 = vpack.c.b16 %v631, %v630
  %v694 = vpack.c.b16 %v633, %v632
  %v695 = vpack.c.b16 %v635, %v634
  %v696 = vpack.c.b16 %v637, %v636
  %v697 = vpack.c.b16 %v639, %v638
  %v698 = vpack.c.b16 %v641, %v640
  %v699 = vpack.c.b16 %v643, %v642
  %v700 = vpack.c.b16 %v645, %v644
  %v701 = vpack.c.b16 %v647, %v646
  %v702 = vpack.c.b16 %v649, %v648
  %v703 = vpack.c.b16 %v651, %v650
  %v704 = vpack.c.b16 %v653, %v652
  %v705 = vpack.c.b16 %v655, %v654
  %v706 = vpack.c.b16 %v657, %v656
  %v707 = vpack.c.b16 %v659, %v658
  %v708 = vpack.c.b16 %v661, %v660
  %v709 = vpack.c.b16 %v663, %v662
  %v710 = vpack.c.b16 %v665, %v664
  %v711 = vpack.c.b16 %v667, %v666
  %v712 = vpack.c.b16 %v669, %v668
  %v713 = vpack.c.b16 %v671, %v670
  %v714 = vpack.c.b16 %v673, %v672
  %v715 = vpack.c.b16 %v675, %v674
  %v716 = vpack.c.b16 %v677, %v676
  %v717 = vpack.c.b16 %v679, %v678
  %v718 = vpack.c.b16 %v681, %v680
  %v719 = vpack.c.b16 %v683, %v682
  %v720 = vpack.c.b16 %v685, %v684
  %v721 = vpack.c.b16 %v687, %v686
  %v722 = vpack.c.b16 %v689, %v688
  %v723 = vpack.c.b16 %v691, %v690
  %756 = vmatprep.subr.bf16.mxu0 0
  %757 = vmatpush1.bf16.msra.mxu0 %v692
  %758 = vmatprep.subr.bf16.mxu0 0
  %759 = vmatpush1.bf16.msra.mxu0 %v693
  %760 = vmatprep.subr.bf16.mxu0 0
  %761 = vmatpush1.bf16.msra.mxu0 %v694
  %762 = vmatprep.subr.bf16.mxu0 0
  %763 = vmatpush1.bf16.msra.mxu0 %v695
  %764 = vmatprep.subr.bf16.mxu0 0
  %765 = vmatpush1.bf16.msra.mxu0 %v696
  %766 = vmatprep.subr.bf16.mxu0 0
  %767 = vmatpush1.bf16.msra.mxu0 %v697
  %768 = vmatprep.subr.bf16.mxu0 0
  %769 = vmatpush1.bf16.msra.mxu0 %v698
  %770 = vmatprep.subr.bf16.mxu0 0
  %771 = vmatpush1.bf16.msra.mxu0 %v699
  %772 = vmatprep.subr.bf16.mxu0 0
  %773 = vmatpush1.bf16.msra.mxu0 %v700
  %774 = vmatprep.subr.bf16.mxu0 0
  %775 = vmatpush1.bf16.msra.mxu0 %v701
  %776 = vmatprep.subr.bf16.mxu0 0
  %777 = vmatpush1.bf16.msra.mxu0 %v702
  %778 = vmatprep.subr.bf16.mxu0 0
  %779 = vmatpush1.bf16.msra.mxu0 %v703
  %780 = vmatprep.subr.bf16.mxu0 0
  %781 = vmatpush1.bf16.msra.mxu0 %v704
  %782 = vmatprep.subr.bf16.mxu0 0
  %783 = vmatpush1.bf16.msra.mxu0 %v705
  %784 = vmatprep.subr.bf16.mxu0 0
  %785 = vmatpush1.bf16.msra.mxu0 %v706
  %786 = vmatprep.subr.bf16.mxu0 0
  %787 = vmatpush1.bf16.msra.mxu0 %v707
  %788 = vmatprep.mubr.bf16.mxu0 %v493
  %789 = vmatmul.mubr.bf16.gmra.mrb[0].mxu0 %v492
  %v790 = vpop.f32.mrb[0].mxu0
  %v791 = vadd.f32 %v563, %v790
  %v792 = vpop.f32.mrb[0].mxu0
  %v793 = vpop.f32.mrb[0].mxu0
  %v794 = vpop.f32.mrb[0].mxu0
  %795 = vdwg.mxu0
  %796 = vmatprep.subr.bf16.mxu0 0
  %797 = vmatpush1.bf16.msra.mxu0 %v708
  %798 = vmatprep.subr.bf16.mxu0 0
  %799 = vmatpush1.bf16.msra.mxu0 %v709
  %800 = vmatprep.subr.bf16.mxu0 0
  %801 = vmatpush1.bf16.msra.mxu0 %v710
  %802 = vmatprep.subr.bf16.mxu0 0
  %803 = vmatpush1.bf16.msra.mxu0 %v711
  %804 = vmatprep.subr.bf16.mxu0 0
  %805 = vmatpush1.bf16.msra.mxu0 %v712
  %806 = vmatprep.subr.bf16.mxu0 0
  %807 = vmatpush1.bf16.msra.mxu0 %v713
  %808 = vmatprep.subr.bf16.mxu0 0
  %809 = vmatpush1.bf16.msra.mxu0 %v714
  %810 = vmatprep.subr.bf16.mxu0 0
  %811 = vmatpush1.bf16.msra.mxu0 %v715
  %812 = vmatprep.subr.bf16.mxu0 0
  %813 = vmatpush1.bf16.msra.mxu0 %v716
  %814 = vmatprep.subr.bf16.mxu0 0
  %815 = vmatpush1.bf16.msra.mxu0 %v717
  %816 = vmatprep.subr.bf16.mxu0 0
  %817 = vmatpush1.bf16.msra.mxu0 %v718
  %818 = vmatprep.subr.bf16.mxu0 0
  %819 = vmatpush1.bf16.msra.mxu0 %v719
  %820 = vmatprep.subr.bf16.mxu0 0
  %821 = vmatpush1.bf16.msra.mxu0 %v720
  %822 = vmatprep.subr.bf16.mxu0 0
  %823 = vmatpush1.bf16.msra.mxu0 %v721
  %824 = vmatprep.subr.bf16.mxu0 0
  %825 = vmatpush1.bf16.msra.mxu0 %v722
  %826 = vmatprep.subr.bf16.mxu0 0
  %827 = vmatpush1.bf16.msra.mxu0 %v723
  %828 = vmatprep.mubr.bf16.mxu0 %v495
  %829 = vmatmul.mubr.bf16.gmra.mrb[0].mxu0 %v494
  %v830 = vpop.f32.mrb[0].mxu0
  %v831 = vadd.f32 %v791, %v830
  %v832 = vpop.f32.mrb[0].mxu0
  %v833 = vpop.f32.mrb[0].mxu0
  %v834 = vpop.f32.mrb[0].mxu0
  %835 = vdwg.mxu0
  %v836 = vpack.c.bf16 %v831, %v831
  %v837 = vld [vmem:[%s5] sm:$0xf]
  %v838 = vld [vmem:[%s5 + $0x4] sm:$0xf]
  %v839 = vld [vmem:[%s5 + $0x8] sm:$0xf]
  %v840 = vld [vmem:[%s5 + $0xc] sm:$0xf]
  %v841 = vld [vmem:[%s5 + $0x10] sm:$0xf]
  %v842 = vld [vmem:[%s5 + $0x14] sm:$0xf]
  %v843 = vld [vmem:[%s5 + $0x18] sm:$0xf]
  %v844 = vld [vmem:[%s5 + $0x1c] sm:$0xf]
  %v845 = vld [vmem:[%s5 + $0x20] sm:$0xf]
  %v846 = vld [vmem:[%s5 + $0x24] sm:$0xf]
  %v847 = vld [vmem:[%s5 + $0x28] sm:$0xf]
  %v848 = vld [vmem:[%s5 + $0x2c] sm:$0xf]
  %v849 = vld [vmem:[%s5 + $0x30] sm:$0xf]
  %v850 = vld [vmem:[%s5 + $0x34] sm:$0xf]
  %v851 = vld [vmem:[%s5 + $0x38] sm:$0xf]
  %v852 = vld [vmem:[%s5 + $0x3c] sm:$0xf]
  %v853 = vld [vmem:[%s7] sm:$0x1]
  %v855 = vlaneseq
  %v856 = vshrl.u32 %v855, 7
  %v857 = vsub.s32 0, %v856
  %v858 = vrot.slane %v853, %v857
  %v876 = vunpack.c.l.b16 %v837
  %v877 = vunpack.c.l.b16 %v838
  %v878 = vunpack.c.l.b16 %v839
  %v879 = vunpack.c.l.b16 %v840
  %v880 = vunpack.c.l.b16 %v841
  %v881 = vunpack.c.l.b16 %v842
  %v882 = vunpack.c.l.b16 %v843
  %v883 = vunpack.c.l.b16 %v844
  %v884 = vunpack.c.l.b16 %v845
  %v885 = vunpack.c.l.b16 %v846
  %v886 = vunpack.c.l.b16 %v847
  %v887 = vunpack.c.l.b16 %v848
  %v888 = vunpack.c.l.b16 %v849
  %v889 = vunpack.c.l.b16 %v850
  %v890 = vunpack.c.l.b16 %v851
  %v891 = vunpack.c.l.b16 %v852
  %v892 = vpack.c.b16 %v877, %v876
  %v893 = vpack.c.b16 %v879, %v878
  %v894 = vpack.c.b16 %v881, %v880
  %v895 = vpack.c.b16 %v883, %v882
  %v896 = vpack.c.b16 %v885, %v884
  %v897 = vpack.c.b16 %v887, %v886
  %v898 = vpack.c.b16 %v889, %v888
  %v899 = vpack.c.b16 %v891, %v890
  %908 = vmatprep.subr.bf16.mxu0 0
  %909 = vmatpush1.bf16.msra.mxu0 %v892
  %910 = vmatprep.subr.bf16.mxu0 0
  %911 = vmatpush1.bf16.msra.mxu0 %v893
  %912 = vmatprep.subr.bf16.mxu0 0
  %913 = vmatpush1.bf16.msra.mxu0 %v894
  %914 = vmatprep.subr.bf16.mxu0 0
  %915 = vmatpush1.bf16.msra.mxu0 %v895
  %916 = vmatprep.subr.bf16.mxu0 0
  %917 = vmatpush1.bf16.msra.mxu0 %v896
  %918 = vmatprep.subr.bf16.mxu0 0
  %919 = vmatpush1.bf16.msra.mxu0 %v897
  %920 = vmatprep.subr.bf16.mxu0 0
  %921 = vmatpush1.bf16.msra.mxu0 %v898
  %922 = vmatprep.subr.bf16.mxu0 0
  %923 = vmatpush1.bf16.msra.mxu0 %v899
  %924 = vmatprep.subr.bf16.mxu0 0
  %925 = vmatpush1.bf16.msra.mxu0 0
  %926 = vmatprep.subr.bf16.mxu0 0
  %927 = vmatpush1.bf16.msra.mxu0 0
  %928 = vmatprep.subr.bf16.mxu0 0
  %929 = vmatpush1.bf16.msra.mxu0 0
  %930 = vmatprep.subr.bf16.mxu0 0
  %931 = vmatpush1.bf16.msra.mxu0 0
  %932 = vmatprep.subr.bf16.mxu0 0
  %933 = vmatpush1.bf16.msra.mxu0 0
  %934 = vmatprep.subr.bf16.mxu0 0
  %935 = vmatpush1.bf16.msra.mxu0 0
  %936 = vmatprep.subr.bf16.mxu0 0
  %937 = vmatpush1.bf16.msra.mxu0 0
  %938 = vmatprep.subr.bf16.mxu0 0
  %939 = vmatpush1.bf16.msra.mxu0 0
  %940 = vmatprep.mubr.bf16.mxu0 0
  %941 = vmatmul.mubr.bf16.gmra.mrb[0].mxu0 %v836
  %v942 = vpop.f32.mrb[0].mxu0
  %v943 = vadd.f32 %v858, %v942
  %v944 = vpop.f32.mrb[0].mxu0
  %v945 = vpop.f32.mrb[0].mxu0
  %v946 = vpop.f32.mrb[0].mxu0
  %947 = vdwg.mxu0
  %v948 = vlaneseq
  %v949 = vand.u32 %v948, 127
  %vm950 = vcmp.lt.s32.totalorder %v949, 4
  %v951 = vsel %vm950, %v943, -1e+30
  %v952 = vsel %vm81, %v951, -inf
  %953 = vmax.xlane.f32.xlu0 %v952
  %v954 = vpop.xlane.xlu0 %953
  %v955 = vsub.f32 %v951, %v954
  %v956 = vmul.f32 %v955, 1.442695
  %v957 = vpow.pop %v956
  %v958 = vsel %vm81, %v957, 0.0
  %959 = vadd.xlane.f32.xlu0 %v958
  %v960 = vpop.xlane.xlu0 %959
  %v961 = vlog2.pop %v960
  %v962 = vmul.f32 %v961, 0.6931472
  %v963 = vsub.f32 %v955, %v962
  %v964 = vmul.f32 %v963, 1.442695
  %v965 = vpow.pop %v964
  %966 = vst [vmem:[%s8] sm:$0x3] %v943
  %967 = vst [vmem:[%s8 + $0x2] sm:$0x3] %v965
  %968 = vst [vmem:[%s8 + $0x4] sm:$0x3] %v963
  // Predicated region
  $region34: #{hdn_forward.1} parent=0 // pred_check
    _
  $region35: #{hdn_forward.1} parent=0 // pred_check_branch
    %970 = sbr.rel (0) target = $region37
  $region36: #{hdn_forward.1} parent=0 // pred_region
    _
  $region37: #{hdn_forward.1} parent=0 // pred_fallthru
    _
  // Predicated region
  $region38: #{hdn_forward.1} parent=0 // pred_check
    _
  $region39: #{hdn_forward.1} parent=0 // pred_check_branch
    %972 = sbr.rel (0) target = $region41
  $region40: #{hdn_forward.1} parent=0 // pred_region
    _
  $region41: #{hdn_forward.1} parent=0 // pred_fallthru
    _

</llo_original>
